<compile_context>
chip_gen: v5e
topology: v5e:2x2
jax: 0.10.0
libtpu: 0.0.40
codegen_flags: <defaults>
</compile_context>

<pallas_src>
import jax
import jax.numpy as jnp
from jax import lax
from jax.experimental import pallas as pl
from jax.experimental.pallas import tpu as pltpu


def lstm_sentiment_kernel(x_ref, wih_ref, whh_ref, b_ref, wfc_ref, bfc_ref,
                          out_ref, xp_ref):
    """One invocation: input projection + full LSTM recurrence + fc + LogSoftmax.

    x_ref   : (S*B, E) f32 VMEM   pre-gathered embeddings, row s*B + b
    wih_ref : (E, 4H)  f32 VMEM   fused W_ih^T, gate column order (i, f, g, o)
    whh_ref : (H, 4H)  f32 VMEM   fused W_hh^T
    b_ref   : (1, 4H)  f32 VMEM   b_ih + b_hh, fused gate order
    wfc_ref : (H, OP)  f32 VMEM   W_fc^T padded to OP=128 lanes with zeros
    bfc_ref : (1, OP)  f32 VMEM   b_fc padded with -1e30
    out_ref : (B, OP)  f32 VMEM   lane-dense log-probs; real cols are [:O]
    xp_ref  : (S*B, 4H) f32 VMEM scratch  x @ W_ih + bias for all timesteps
    """
    SB = x_ref.shape[0]
    B = out_ref.shape[0]
    S = SB // B
    H = whh_ref.shape[0]

    # --- Hoisted input projection: one MXU call for all S timesteps. ---
    xp_ref[...] = (jnp.dot(x_ref[...], wih_ref[...],
                           preferred_element_type=jnp.float32)
                   + b_ref[...])                               # (S*B, 4H)

    # Recurrent weights stay resident in vregs across the whole loop.
    whh = whh_ref[...]                                         # (H, 4H)

    def step(t, carry):
        h, c = carry
        # Pre-activations for timestep t: rows [t*B, t*B + B) of the scratch.
        xp_t = xp_ref[pl.ds(t * B, B), :]                      # (B, 4H)
        pre = xp_t + jnp.dot(h, whh,
                             preferred_element_type=jnp.float32)  # (B, 4H)

        # Static 32-lane gate slices (PyTorch gate order: i, f, g, o).
        i_t = jax.nn.sigmoid(pre[:, 0:H])
        f_t = jax.nn.sigmoid(pre[:, H:2 * H])
        g_t = jnp.tanh(pre[:, 2 * H:3 * H])
        o_t = jax.nn.sigmoid(pre[:, 3 * H:4 * H])

        c_new = f_t * c + i_t * g_t
        h_new = o_t * jnp.tanh(c_new)
        return h_new, c_new

    h0 = jnp.zeros((B, H), jnp.float32)
    c0 = jnp.zeros((B, H), jnp.float32)
    h_last, _ = lax.fori_loop(0, S, step, (h0, c0), unroll=True)

    # fc on hidden[-1] followed by LogSoftmax along dim=1.  Padded lanes carry
    # a -1e30 bias (and exactly-zero W_fc columns) so they never win the max
    # and their exp underflows to 0.
    logits = (jnp.dot(h_last, wfc_ref[...],
                      preferred_element_type=jnp.float32)
              + bfc_ref[...])                                  # (B, OP)
    m = jnp.max(logits, axis=1, keepdims=True)
    lse = m + jnp.log(jnp.sum(jnp.exp(logits - m), axis=1, keepdims=True))
    out_ref[...] = logits - lse


@jax.jit
def sentiment_forward(text, emb_table, w_ih, w_hh, b_ih, b_hh, w_fc, b_fc):
    """text: (S, B) int32 token ids (seq-first, PyTorch nn.LSTM default).
    Returns log-probs (B, output_dim) float32."""
    S, B = text.shape
    V, E = emb_table.shape
    H = w_hh.shape[1]
    O = w_fc.shape[0]
    OP = max(128, ((O + 127) // 128) * 128)    # lane-dense padded output width

    # --- wrapper-side layout plumbing (zero in-kernel cost) ---
    # Embedding gather outside the kernel: one XLA gather, ids clamped so an
    # out-of-range id cannot silently read adjacent VMEM inside the kernel.
    ids = jnp.clip(text.astype(jnp.int32), 0, V - 1)
    x = emb_table.astype(jnp.float32)[ids]                 # (S, B, E)
    x2d = x.reshape(S * B, E)                              # row s*B + b

    # Fused gate layout: 4H along lanes, PyTorch gate order (i, f, g, o) kept.
    wih_f = w_ih.T.astype(jnp.float32)                     # (E, 4H)
    whh_f = w_hh.T.astype(jnp.float32)                     # (H, 4H)
    bias_f = (b_ih + b_hh).reshape(1, 4 * H).astype(jnp.float32)
    wfc_pad = jnp.zeros((H, OP), jnp.float32).at[:, :O].set(w_fc.T)
    bfc_pad = jnp.full((1, OP), -1e30, jnp.float32).at[0, :O].set(b_fc)

    out = pl.pallas_call(
        lstm_sentiment_kernel,
        out_shape=jax.ShapeDtypeStruct((B, OP), jnp.float32),
        in_specs=[
            pl.BlockSpec(memory_space=pltpu.MemorySpace.VMEM),   # x (S*B, E)
            pl.BlockSpec(memory_space=pltpu.MemorySpace.VMEM),   # W_ih fused
            pl.BlockSpec(memory_space=pltpu.MemorySpace.VMEM),   # W_hh fused
            pl.BlockSpec(memory_space=pltpu.MemorySpace.VMEM),   # bias fused
            pl.BlockSpec(memory_space=pltpu.MemorySpace.VMEM),   # W_fc padded
            pl.BlockSpec(memory_space=pltpu.MemorySpace.VMEM),   # b_fc padded
        ],
        out_specs=pl.BlockSpec(memory_space=pltpu.MemorySpace.VMEM),
        scratch_shapes=[pltpu.VMEM((S * B, 4 * H), jnp.float32)],
        # Explicit (modest) VMEM budget: total residency here is ~100 KiB,
        # comfortably under the 16 MiB scoped default on v5e and the 64 MiB
        # physical VMEM on v7x.
        compiler_params=pltpu.CompilerParams(
            vmem_limit_bytes=8 * 1024 * 1024),
    )(x2d, wih_f, whh_f, bias_f, wfc_pad, bfc_pad)

    return out[:, :O]


def reference_forward(text, emb_table, w_ih, w_hh, b_ih, b_hh, w_fc, b_fc):
    """Pure-JAX reference mirroring the PyTorch forward."""
    x = emb_table[text]                       # (S, B, E)
    B = x.shape[1]
    H = w_hh.shape[1]

    def step(carry, x_t):
        h, c = carry
        gates = x_t @ w_ih.T + h @ w_hh.T + b_ih + b_hh
        i = jax.nn.sigmoid(gates[:, 0:H])
        f = jax.nn.sigmoid(gates[:, H:2 * H])
        g = jnp.tanh(gates[:, 2 * H:3 * H])
        o = jax.nn.sigmoid(gates[:, 3 * H:4 * H])
        c = f * c + i * g
        h = o * jnp.tanh(c)
        return (h, c), None

    h0 = jnp.zeros((B, H), jnp.float32)
    (h, _), _ = jax.lax.scan(step, (h0, h0), x)
    logits = h @ w_fc.T + b_fc
    return jax.nn.log_softmax(logits, axis=1)


if __name__ == "__main__":
    input_dim = 50        # vocab size
    embedding_dim = 16
    hidden_dim = 32
    output_dim = 4
    seq_len = 8
    batch = 2

    key = jax.random.PRNGKey(0)
    keys = jax.random.split(key, 8)
    scale = 1.0 / jnp.sqrt(hidden_dim)

    emb_table = jax.random.normal(keys[0], (input_dim, embedding_dim),
                                  jnp.float32)
    w_ih = jax.random.uniform(keys[1], (4 * hidden_dim, embedding_dim),
                              jnp.float32, -scale, scale)
    w_hh = jax.random.uniform(keys[2], (4 * hidden_dim, hidden_dim),
                              jnp.float32, -scale, scale)
    b_ih = jax.random.uniform(keys[3], (4 * hidden_dim,), jnp.float32,
                              -scale, scale)
    b_hh = jax.random.uniform(keys[4], (4 * hidden_dim,), jnp.float32,
                              -scale, scale)
    w_fc = jax.random.uniform(keys[5], (output_dim, hidden_dim), jnp.float32,
                              -scale, scale)
    b_fc = jax.random.uniform(keys[6], (output_dim,), jnp.float32,
                              -scale, scale)

    text = jax.random.randint(keys[7], (seq_len, batch), 0, input_dim,
                              jnp.int32)

    out = sentiment_forward(text, emb_table, w_ih, w_hh, b_ih, b_hh,
                            w_fc, b_fc)
    out = jax.block_until_ready(out)

    ref = reference_forward(text, emb_table, w_ih, w_hh, b_ih, b_hh,
                            w_fc, b_fc)
    assert out.shape == (batch, output_dim)
    assert jnp.allclose(out, ref, atol=1e-4, rtol=1e-4)

    print("KERNEL_OK")
</pallas_src>

<mosaic_0001>
module attributes {stable_mosaic.version = 11 : i64} {
  func.func @lstm_sentiment_kernel(%arg0: memref<16x16xf32, #tpu.memory_space<vmem>>, %arg1: memref<16x128xf32, #tpu.memory_space<vmem>>, %arg2: memref<32x128xf32, #tpu.memory_space<vmem>>, %arg3: memref<1x128xf32, #tpu.memory_space<vmem>>, %arg4: memref<32x128xf32, #tpu.memory_space<vmem>>, %arg5: memref<1x128xf32, #tpu.memory_space<vmem>>, %arg6: memref<2x128xf32, #tpu.memory_space<vmem>>, %arg7: memref<16x128xf32, #tpu.memory_space<vmem>>) attributes {dimension_semantics = [], scalar_prefetch = 0 : i64, scratch_operands = 1 : i64, tpu.core_type = #tpu.core_type<tc>} {
    %c0 = arith.constant 0 : index
    %c0_0 = arith.constant 0 : index
    %0 = vector.load %arg0[%c0, %c0_0] : memref<16x16xf32, #tpu.memory_space<vmem>>, vector<16x16xf32>
    %c0_1 = arith.constant 0 : index
    %c0_2 = arith.constant 0 : index
    %1 = vector.load %arg1[%c0_1, %c0_2] : memref<16x128xf32, #tpu.memory_space<vmem>>, vector<16x128xf32>
    %cst = arith.constant dense<0.000000e+00> : vector<16x128xf32>
    %2 = tpu.matmul %0, %1, %cst {dimension_numbers = #tpu.dot_dimension_numbers<[1], [0], [0], [1], [0, 0, 1, 1], [], []>} : vector<16x16xf32>, vector<16x128xf32>, vector<16x128xf32> -> vector<16x128xf32>
    %c0_3 = arith.constant 0 : index
    %c0_4 = arith.constant 0 : index
    %3 = vector.load %arg3[%c0_3, %c0_4] : memref<1x128xf32, #tpu.memory_space<vmem>>, vector<1x128xf32>
    %4 = vector.broadcast %3 : vector<1x128xf32> to vector<16x128xf32>
    %5 = arith.addf %2, %4 : vector<16x128xf32>
    %c0_5 = arith.constant 0 : index
    %c0_6 = arith.constant 0 : index
    %6 = vector.load %arg7[%c0_5, %c0_6] : memref<16x128xf32, #tpu.memory_space<vmem>>, vector<16x128xf32>
    tpu.vector_store %arg7[%c0_5, %c0_6], %5 {strides = array<i32>} : memref<16x128xf32, #tpu.memory_space<vmem>>, vector<16x128xf32>,
    %c0_7 = arith.constant 0 : index
    %c0_8 = arith.constant 0 : index
    %7 = vector.load %arg2[%c0_7, %c0_8] : memref<32x128xf32, #tpu.memory_space<vmem>>, vector<32x128xf32>
    %cst_9 = arith.constant 0.000000e+00 : f32
    %8 = vector.broadcast %cst_9 : f32 to vector<2x32xf32>
    %cst_10 = arith.constant 0.000000e+00 : f32
    %9 = vector.broadcast %cst_10 : f32 to vector<2x32xf32>
    %c0_i32 = arith.constant 0 : i32
    %c2_i32 = arith.constant 2 : i32
    %10 = arith.muli %c0_i32, %c2_i32 : i32
    %11 = arith.index_cast %10 : i32 to index
    %c0_11 = arith.constant 0 : index
    %12 = vector.load %arg7[%11, %c0_11] : memref<16x128xf32, #tpu.memory_space<vmem>>, vector<2x128xf32>
    %cst_12 = arith.constant dense<0.000000e+00> : vector<2x128xf32>
    %13 = tpu.matmul %8, %7, %cst_12 {dimension_numbers = #tpu.dot_dimension_numbers<[1], [0], [0], [1], [0, 0, 1, 1], [], []>} : vector<2x32xf32>, vector<32x128xf32>, vector<2x128xf32> -> vector<2x128xf32>
    %14 = arith.addf %12, %13 : vector<2x128xf32>
    %15 = vector.extract_strided_slice %14 {offsets = [0, 0], sizes = [2, 32], strides = [1, 1]} : vector<2x128xf32> to vector<2x32xf32>
    %16 = arith.negf %15 : vector<2x32xf32>
    %17 = math.exp %16 : vector<2x32xf32>
    %cst_13 = arith.constant 1.000000e+00 : f32
    %18 = vector.broadcast %cst_13 : f32 to vector<2x32xf32>
    %19 = arith.addf %18, %17 : vector<2x32xf32>
    %20 = arith.divf %18, %19 : vector<2x32xf32>
    %21 = vector.extract_strided_slice %14 {offsets = [0, 32], sizes = [2, 32], strides = [1, 1]} : vector<2x128xf32> to vector<2x32xf32>
    %22 = arith.negf %21 : vector<2x32xf32>
    %23 = math.exp %22 : vector<2x32xf32>
    %cst_14 = arith.constant 1.000000e+00 : f32
    %24 = vector.broadcast %cst_14 : f32 to vector<2x32xf32>
    %25 = arith.addf %24, %23 : vector<2x32xf32>
    %26 = arith.divf %24, %25 : vector<2x32xf32>
    %27 = vector.extract_strided_slice %14 {offsets = [0, 64], sizes = [2, 32], strides = [1, 1]} : vector<2x128xf32> to vector<2x32xf32>
    %28 = math.tanh %27 : vector<2x32xf32>
    %29 = vector.extract_strided_slice %14 {offsets = [0, 96], sizes = [2, 32], strides = [1, 1]} : vector<2x128xf32> to vector<2x32xf32>
    %30 = arith.negf %29 : vector<2x32xf32>
    %31 = math.exp %30 : vector<2x32xf32>
    %cst_15 = arith.constant 1.000000e+00 : f32
    %32 = vector.broadcast %cst_15 : f32 to vector<2x32xf32>
    %33 = arith.addf %32, %31 : vector<2x32xf32>
    %34 = arith.divf %32, %33 : vector<2x32xf32>
    %35 = arith.mulf %26, %9 : vector<2x32xf32>
    %36 = arith.mulf %20, %28 : vector<2x32xf32>
    %37 = arith.addf %35, %36 : vector<2x32xf32>
    %38 = math.tanh %37 : vector<2x32xf32>
    %39 = arith.mulf %34, %38 : vector<2x32xf32>
    %c1_i32 = arith.constant 1 : i32
    %c2_i32_16 = arith.constant 2 : i32
    %40 = arith.muli %c1_i32, %c2_i32_16 : i32
    %41 = arith.index_cast %40 : i32 to index
    %c0_17 = arith.constant 0 : index
    %42 = vector.load %arg7[%41, %c0_17] : memref<16x128xf32, #tpu.memory_space<vmem>>, vector<2x128xf32>
    %cst_18 = arith.constant dense<0.000000e+00> : vector<2x128xf32>
    %43 = tpu.matmul %39, %7, %cst_18 {dimension_numbers = #tpu.dot_dimension_numbers<[1], [0], [0], [1], [0, 0, 1, 1], [], []>} : vector<2x32xf32>, vector<32x128xf32>, vector<2x128xf32> -> vector<2x128xf32>
    %44 = arith.addf %42, %43 : vector<2x128xf32>
    %45 = vector.extract_strided_slice %44 {offsets = [0, 0], sizes = [2, 32], strides = [1, 1]} : vector<2x128xf32> to vector<2x32xf32>
    %46 = arith.negf %45 : vector<2x32xf32>
    %47 = math.exp %46 : vector<2x32xf32>
    %cst_19 = arith.constant 1.000000e+00 : f32
    %48 = vector.broadcast %cst_19 : f32 to vector<2x32xf32>
    %49 = arith.addf %48, %47 : vector<2x32xf32>
    %50 = arith.divf %48, %49 : vector<2x32xf32>
    %51 = vector.extract_strided_slice %44 {offsets = [0, 32], sizes = [2, 32], strides = [1, 1]} : vector<2x128xf32> to vector<2x32xf32>
    %52 = arith.negf %51 : vector<2x32xf32>
    %53 = math.exp %52 : vector<2x32xf32>
    %cst_20 = arith.constant 1.000000e+00 : f32
    %54 = vector.broadcast %cst_20 : f32 to vector<2x32xf32>
    %55 = arith.addf %54, %53 : vector<2x32xf32>
    %56 = arith.divf %54, %55 : vector<2x32xf32>
    %57 = vector.extract_strided_slice %44 {offsets = [0, 64], sizes = [2, 32], strides = [1, 1]} : vector<2x128xf32> to vector<2x32xf32>
    %58 = math.tanh %57 : vector<2x32xf32>
    %59 = vector.extract_strided_slice %44 {offsets = [0, 96], sizes = [2, 32], strides = [1, 1]} : vector<2x128xf32> to vector<2x32xf32>
    %60 = arith.negf %59 : vector<2x32xf32>
    %61 = math.exp %60 : vector<2x32xf32>
    %cst_21 = arith.constant 1.000000e+00 : f32
    %62 = vector.broadcast %cst_21 : f32 to vector<2x32xf32>
    %63 = arith.addf %62, %61 : vector<2x32xf32>
    %64 = arith.divf %62, %63 : vector<2x32xf32>
    %65 = arith.mulf %56, %37 : vector<2x32xf32>
    %66 = arith.mulf %50, %58 : vector<2x32xf32>
    %67 = arith.addf %65, %66 : vector<2x32xf32>
    %68 = math.tanh %67 : vector<2x32xf32>
    %69 = arith.mulf %64, %68 : vector<2x32xf32>
    %c2_i32_22 = arith.constant 2 : i32
    %c2_i32_23 = arith.constant 2 : i32
    %70 = arith.muli %c2_i32_22, %c2_i32_23 : i32
    %71 = arith.index_cast %70 : i32 to index
    %c0_24 = arith.constant 0 : index
    %72 = vector.load %arg7[%71, %c0_24] : memref<16x128xf32, #tpu.memory_space<vmem>>, vector<2x128xf32>
    %cst_25 = arith.constant dense<0.000000e+00> : vector<2x128xf32>
    %73 = tpu.matmul %69, %7, %cst_25 {dimension_numbers = #tpu.dot_dimension_numbers<[1], [0], [0], [1], [0, 0, 1, 1], [], []>} : vector<2x32xf32>, vector<32x128xf32>, vector<2x128xf32> -> vector<2x128xf32>
    %74 = arith.addf %72, %73 : vector<2x128xf32>
    %75 = vector.extract_strided_slice %74 {offsets = [0, 0], sizes = [2, 32], strides = [1, 1]} : vector<2x128xf32> to vector<2x32xf32>
    %76 = arith.negf %75 : vector<2x32xf32>
    %77 = math.exp %76 : vector<2x32xf32>
    %cst_26 = arith.constant 1.000000e+00 : f32
    %78 = vector.broadcast %cst_26 : f32 to vector<2x32xf32>
    %79 = arith.addf %78, %77 : vector<2x32xf32>
    %80 = arith.divf %78, %79 : vector<2x32xf32>
    %81 = vector.extract_strided_slice %74 {offsets = [0, 32], sizes = [2, 32], strides = [1, 1]} : vector<2x128xf32> to vector<2x32xf32>
    %82 = arith.negf %81 : vector<2x32xf32>
    %83 = math.exp %82 : vector<2x32xf32>
    %cst_27 = arith.constant 1.000000e+00 : f32
    %84 = vector.broadcast %cst_27 : f32 to vector<2x32xf32>
    %85 = arith.addf %84, %83 : vector<2x32xf32>
    %86 = arith.divf %84, %85 : vector<2x32xf32>
    %87 = vector.extract_strided_slice %74 {offsets = [0, 64], sizes = [2, 32], strides = [1, 1]} : vector<2x128xf32> to vector<2x32xf32>
    %88 = math.tanh %87 : vector<2x32xf32>
    %89 = vector.extract_strided_slice %74 {offsets = [0, 96], sizes = [2, 32], strides = [1, 1]} : vector<2x128xf32> to vector<2x32xf32>
    %90 = arith.negf %89 : vector<2x32xf32>
    %91 = math.exp %90 : vector<2x32xf32>
    %cst_28 = arith.constant 1.000000e+00 : f32
    %92 = vector.broadcast %cst_28 : f32 to vector<2x32xf32>
    %93 = arith.addf %92, %91 : vector<2x32xf32>
    %94 = arith.divf %92, %93 : vector<2x32xf32>
    %95 = arith.mulf %86, %67 : vector<2x32xf32>
    %96 = arith.mulf %80, %88 : vector<2x32xf32>
    %97 = arith.addf %95, %96 : vector<2x32xf32>
    %98 = math.tanh %97 : vector<2x32xf32>
    %99 = arith.mulf %94, %98 : vector<2x32xf32>
    %c3_i32 = arith.constant 3 : i32
    %c2_i32_29 = arith.constant 2 : i32
    %100 = arith.muli %c3_i32, %c2_i32_29 : i32
    %101 = arith.index_cast %100 : i32 to index
    %c0_30 = arith.constant 0 : index
    %102 = vector.load %arg7[%101, %c0_30] : memref<16x128xf32, #tpu.memory_space<vmem>>, vector<2x128xf32>
    %cst_31 = arith.constant dense<0.000000e+00> : vector<2x128xf32>
    %103 = tpu.matmul %99, %7, %cst_31 {dimension_numbers = #tpu.dot_dimension_numbers<[1], [0], [0], [1], [0, 0, 1, 1], [], []>} : vector<2x32xf32>, vector<32x128xf32>, vector<2x128xf32> -> vector<2x128xf32>
    %104 = arith.addf %102, %103 : vector<2x128xf32>
    %105 = vector.extract_strided_slice %104 {offsets = [0, 0], sizes = [2, 32], strides = [1, 1]} : vector<2x128xf32> to vector<2x32xf32>
    %106 = arith.negf %105 : vector<2x32xf32>
    %107 = math.exp %106 : vector<2x32xf32>
    %cst_32 = arith.constant 1.000000e+00 : f32
    %108 = vector.broadcast %cst_32 : f32 to vector<2x32xf32>
    %109 = arith.addf %108, %107 : vector<2x32xf32>
    %110 = arith.divf %108, %109 : vector<2x32xf32>
    %111 = vector.extract_strided_slice %104 {offsets = [0, 32], sizes = [2, 32], strides = [1, 1]} : vector<2x128xf32> to vector<2x32xf32>
    %112 = arith.negf %111 : vector<2x32xf32>
    %113 = math.exp %112 : vector<2x32xf32>
    %cst_33 = arith.constant 1.000000e+00 : f32
    %114 = vector.broadcast %cst_33 : f32 to vector<2x32xf32>
    %115 = arith.addf %114, %113 : vector<2x32xf32>
    %116 = arith.divf %114, %115 : vector<2x32xf32>
    %117 = vector.extract_strided_slice %104 {offsets = [0, 64], sizes = [2, 32], strides = [1, 1]} : vector<2x128xf32> to vector<2x32xf32>
    %118 = math.tanh %117 : vector<2x32xf32>
    %119 = vector.extract_strided_slice %104 {offsets = [0, 96], sizes = [2, 32], strides = [1, 1]} : vector<2x128xf32> to vector<2x32xf32>
    %120 = arith.negf %119 : vector<2x32xf32>
    %121 = math.exp %120 : vector<2x32xf32>
    %cst_34 = arith.constant 1.000000e+00 : f32
    %122 = vector.broadcast %cst_34 : f32 to vector<2x32xf32>
    %123 = arith.addf %122, %121 : vector<2x32xf32>
    %124 = arith.divf %122, %123 : vector<2x32xf32>
    %125 = arith.mulf %116, %97 : vector<2x32xf32>
    %126 = arith.mulf %110, %118 : vector<2x32xf32>
    %127 = arith.addf %125, %126 : vector<2x32xf32>
    %128 = math.tanh %127 : vector<2x32xf32>
    %129 = arith.mulf %124, %128 : vector<2x32xf32>
    %c4_i32 = arith.constant 4 : i32
    %c2_i32_35 = arith.constant 2 : i32
    %130 = arith.muli %c4_i32, %c2_i32_35 : i32
    %131 = arith.index_cast %130 : i32 to index
    %c0_36 = arith.constant 0 : index
    %132 = vector.load %arg7[%131, %c0_36] : memref<16x128xf32, #tpu.memory_space<vmem>>, vector<2x128xf32>
    %cst_37 = arith.constant dense<0.000000e+00> : vector<2x128xf32>
    %133 = tpu.matmul %129, %7, %cst_37 {dimension_numbers = #tpu.dot_dimension_numbers<[1], [0], [0], [1], [0, 0, 1, 1], [], []>} : vector<2x32xf32>, vector<32x128xf32>, vector<2x128xf32> -> vector<2x128xf32>
    %134 = arith.addf %132, %133 : vector<2x128xf32>
    %135 = vector.extract_strided_slice %134 {offsets = [0, 0], sizes = [2, 32], strides = [1, 1]} : vector<2x128xf32> to vector<2x32xf32>
    %136 = arith.negf %135 : vector<2x32xf32>
    %137 = math.exp %136 : vector<2x32xf32>
    %cst_38 = arith.constant 1.000000e+00 : f32
    %138 = vector.broadcast %cst_38 : f32 to vector<2x32xf32>
    %139 = arith.addf %138, %137 : vector<2x32xf32>
    %140 = arith.divf %138, %139 : vector<2x32xf32>
    %141 = vector.extract_strided_slice %134 {offsets = [0, 32], sizes = [2, 32], strides = [1, 1]} : vector<2x128xf32> to vector<2x32xf32>
    %142 = arith.negf %141 : vector<2x32xf32>
    %143 = math.exp %142 : vector<2x32xf32>
    %cst_39 = arith.constant 1.000000e+00 : f32
    %144 = vector.broadcast %cst_39 : f32 to vector<2x32xf32>
    %145 = arith.addf %144, %143 : vector<2x32xf32>
    %146 = arith.divf %144, %145 : vector<2x32xf32>
    %147 = vector.extract_strided_slice %134 {offsets = [0, 64], sizes = [2, 32], strides = [1, 1]} : vector<2x128xf32> to vector<2x32xf32>
    %148 = math.tanh %147 : vector<2x32xf32>
    %149 = vector.extract_strided_slice %134 {offsets = [0, 96], sizes = [2, 32], strides = [1, 1]} : vector<2x128xf32> to vector<2x32xf32>
    %150 = arith.negf %149 : vector<2x32xf32>
    %151 = math.exp %150 : vector<2x32xf32>
    %cst_40 = arith.constant 1.000000e+00 : f32
    %152 = vector.broadcast %cst_40 : f32 to vector<2x32xf32>
    %153 = arith.addf %152, %151 : vector<2x32xf32>
    %154 = arith.divf %152, %153 : vector<2x32xf32>
    %155 = arith.mulf %146, %127 : vector<2x32xf32>
    %156 = arith.mulf %140, %148 : vector<2x32xf32>
    %157 = arith.addf %155, %156 : vector<2x32xf32>
    %158 = math.tanh %157 : vector<2x32xf32>
    %159 = arith.mulf %154, %158 : vector<2x32xf32>
    %c5_i32 = arith.constant 5 : i32
    %c2_i32_41 = arith.constant 2 : i32
    %160 = arith.muli %c5_i32, %c2_i32_41 : i32
    %161 = arith.index_cast %160 : i32 to index
    %c0_42 = arith.constant 0 : index
    %162 = vector.load %arg7[%161, %c0_42] : memref<16x128xf32, #tpu.memory_space<vmem>>, vector<2x128xf32>
    %cst_43 = arith.constant dense<0.000000e+00> : vector<2x128xf32>
    %163 = tpu.matmul %159, %7, %cst_43 {dimension_numbers = #tpu.dot_dimension_numbers<[1], [0], [0], [1], [0, 0, 1, 1], [], []>} : vector<2x32xf32>, vector<32x128xf32>, vector<2x128xf32> -> vector<2x128xf32>
    %164 = arith.addf %162, %163 : vector<2x128xf32>
    %165 = vector.extract_strided_slice %164 {offsets = [0, 0], sizes = [2, 32], strides = [1, 1]} : vector<2x128xf32> to vector<2x32xf32>
    %166 = arith.negf %165 : vector<2x32xf32>
    %167 = math.exp %166 : vector<2x32xf32>
    %cst_44 = arith.constant 1.000000e+00 : f32
    %168 = vector.broadcast %cst_44 : f32 to vector<2x32xf32>
    %169 = arith.addf %168, %167 : vector<2x32xf32>
    %170 = arith.divf %168, %169 : vector<2x32xf32>
    %171 = vector.extract_strided_slice %164 {offsets = [0, 32], sizes = [2, 32], strides = [1, 1]} : vector<2x128xf32> to vector<2x32xf32>
    %172 = arith.negf %171 : vector<2x32xf32>
    %173 = math.exp %172 : vector<2x32xf32>
    %cst_45 = arith.constant 1.000000e+00 : f32
    %174 = vector.broadcast %cst_45 : f32 to vector<2x32xf32>
    %175 = arith.addf %174, %173 : vector<2x32xf32>
    %176 = arith.divf %174, %175 : vector<2x32xf32>
    %177 = vector.extract_strided_slice %164 {offsets = [0, 64], sizes = [2, 32], strides = [1, 1]} : vector<2x128xf32> to vector<2x32xf32>
    %178 = math.tanh %177 : vector<2x32xf32>
    %179 = vector.extract_strided_slice %164 {offsets = [0, 96], sizes = [2, 32], strides = [1, 1]} : vector<2x128xf32> to vector<2x32xf32>
    %180 = arith.negf %179 : vector<2x32xf32>
    %181 = math.exp %180 : vector<2x32xf32>
    %cst_46 = arith.constant 1.000000e+00 : f32
    %182 = vector.broadcast %cst_46 : f32 to vector<2x32xf32>
    %183 = arith.addf %182, %181 : vector<2x32xf32>
    %184 = arith.divf %182, %183 : vector<2x32xf32>
    %185 = arith.mulf %176, %157 : vector<2x32xf32>
    %186 = arith.mulf %170, %178 : vector<2x32xf32>
    %187 = arith.addf %185, %186 : vector<2x32xf32>
    %188 = math.tanh %187 : vector<2x32xf32>
    %189 = arith.mulf %184, %188 : vector<2x32xf32>
    %c6_i32 = arith.constant 6 : i32
    %c2_i32_47 = arith.constant 2 : i32
    %190 = arith.muli %c6_i32, %c2_i32_47 : i32
    %191 = arith.index_cast %190 : i32 to index
    %c0_48 = arith.constant 0 : index
    %192 = vector.load %arg7[%191, %c0_48] : memref<16x128xf32, #tpu.memory_space<vmem>>, vector<2x128xf32>
    %cst_49 = arith.constant dense<0.000000e+00> : vector<2x128xf32>
    %193 = tpu.matmul %189, %7, %cst_49 {dimension_numbers = #tpu.dot_dimension_numbers<[1], [0], [0], [1], [0, 0, 1, 1], [], []>} : vector<2x32xf32>, vector<32x128xf32>, vector<2x128xf32> -> vector<2x128xf32>
    %194 = arith.addf %192, %193 : vector<2x128xf32>
    %195 = vector.extract_strided_slice %194 {offsets = [0, 0], sizes = [2, 32], strides = [1, 1]} : vector<2x128xf32> to vector<2x32xf32>
    %196 = arith.negf %195 : vector<2x32xf32>
    %197 = math.exp %196 : vector<2x32xf32>
    %cst_50 = arith.constant 1.000000e+00 : f32
    %198 = vector.broadcast %cst_50 : f32 to vector<2x32xf32>
    %199 = arith.addf %198, %197 : vector<2x32xf32>
    %200 = arith.divf %198, %199 : vector<2x32xf32>
    %201 = vector.extract_strided_slice %194 {offsets = [0, 32], sizes = [2, 32], strides = [1, 1]} : vector<2x128xf32> to vector<2x32xf32>
    %202 = arith.negf %201 : vector<2x32xf32>
    %203 = math.exp %202 : vector<2x32xf32>
    %cst_51 = arith.constant 1.000000e+00 : f32
    %204 = vector.broadcast %cst_51 : f32 to vector<2x32xf32>
    %205 = arith.addf %204, %203 : vector<2x32xf32>
    %206 = arith.divf %204, %205 : vector<2x32xf32>
    %207 = vector.extract_strided_slice %194 {offsets = [0, 64], sizes = [2, 32], strides = [1, 1]} : vector<2x128xf32> to vector<2x32xf32>
    %208 = math.tanh %207 : vector<2x32xf32>
    %209 = vector.extract_strided_slice %194 {offsets = [0, 96], sizes = [2, 32], strides = [1, 1]} : vector<2x128xf32> to vector<2x32xf32>
    %210 = arith.negf %209 : vector<2x32xf32>
    %211 = math.exp %210 : vector<2x32xf32>
    %cst_52 = arith.constant 1.000000e+00 : f32
    %212 = vector.broadcast %cst_52 : f32 to vector<2x32xf32>
    %213 = arith.addf %212, %211 : vector<2x32xf32>
    %214 = arith.divf %212, %213 : vector<2x32xf32>
    %215 = arith.mulf %206, %187 : vector<2x32xf32>
    %216 = arith.mulf %200, %208 : vector<2x32xf32>
    %217 = arith.addf %215, %216 : vector<2x32xf32>
    %218 = math.tanh %217 : vector<2x32xf32>
    %219 = arith.mulf %214, %218 : vector<2x32xf32>
    %c7_i32 = arith.constant 7 : i32
    %c2_i32_53 = arith.constant 2 : i32
    %220 = arith.muli %c7_i32, %c2_i32_53 : i32
    %221 = arith.index_cast %220 : i32 to index
    %c0_54 = arith.constant 0 : index
    %222 = vector.load %arg7[%221, %c0_54] : memref<16x128xf32, #tpu.memory_space<vmem>>, vector<2x128xf32>
    %cst_55 = arith.constant dense<0.000000e+00> : vector<2x128xf32>
    %223 = tpu.matmul %219, %7, %cst_55 {dimension_numbers = #tpu.dot_dimension_numbers<[1], [0], [0], [1], [0, 0, 1, 1], [], []>} : vector<2x32xf32>, vector<32x128xf32>, vector<2x128xf32> -> vector<2x128xf32>
    %224 = arith.addf %222, %223 : vector<2x128xf32>
    %225 = vector.extract_strided_slice %224 {offsets = [0, 0], sizes = [2, 32], strides = [1, 1]} : vector<2x128xf32> to vector<2x32xf32>
    %226 = arith.negf %225 : vector<2x32xf32>
    %227 = math.exp %226 : vector<2x32xf32>
    %cst_56 = arith.constant 1.000000e+00 : f32
    %228 = vector.broadcast %cst_56 : f32 to vector<2x32xf32>
    %229 = arith.addf %228, %227 : vector<2x32xf32>
    %230 = arith.divf %228, %229 : vector<2x32xf32>
    %231 = vector.extract_strided_slice %224 {offsets = [0, 32], sizes = [2, 32], strides = [1, 1]} : vector<2x128xf32> to vector<2x32xf32>
    %232 = arith.negf %231 : vector<2x32xf32>
    %233 = math.exp %232 : vector<2x32xf32>
    %cst_57 = arith.constant 1.000000e+00 : f32
    %234 = vector.broadcast %cst_57 : f32 to vector<2x32xf32>
    %235 = arith.addf %234, %233 : vector<2x32xf32>
    %236 = arith.divf %234, %235 : vector<2x32xf32>
    %237 = vector.extract_strided_slice %224 {offsets = [0, 64], sizes = [2, 32], strides = [1, 1]} : vector<2x128xf32> to vector<2x32xf32>
    %238 = math.tanh %237 : vector<2x32xf32>
    %239 = vector.extract_strided_slice %224 {offsets = [0, 96], sizes = [2, 32], strides = [1, 1]} : vector<2x128xf32> to vector<2x32xf32>
    %240 = arith.negf %239 : vector<2x32xf32>
    %241 = math.exp %240 : vector<2x32xf32>
    %cst_58 = arith.constant 1.000000e+00 : f32
    %242 = vector.broadcast %cst_58 : f32 to vector<2x32xf32>
    %243 = arith.addf %242, %241 : vector<2x32xf32>
    %244 = arith.divf %242, %243 : vector<2x32xf32>
    %245 = arith.mulf %236, %217 : vector<2x32xf32>
    %246 = arith.mulf %230, %238 : vector<2x32xf32>
    %247 = arith.addf %245, %246 : vector<2x32xf32>
    %248 = math.tanh %247 : vector<2x32xf32>
    %249 = arith.mulf %244, %248 : vector<2x32xf32>
    %c8_i32 = arith.constant 8 : i32
    %c0_59 = arith.constant 0 : index
    %c0_60 = arith.constant 0 : index
    %250 = vector.load %arg4[%c0_59, %c0_60] : memref<32x128xf32, #tpu.memory_space<vmem>>, vector<32x128xf32>
    %cst_61 = arith.constant dense<0.000000e+00> : vector<2x128xf32>
    %251 = tpu.matmul %249, %250, %cst_61 {dimension_numbers = #tpu.dot_dimension_numbers<[1], [0], [0], [1], [0, 0, 1, 1], [], []>} : vector<2x32xf32>, vector<32x128xf32>, vector<2x128xf32> -> vector<2x128xf32>
    %c0_62 = arith.constant 0 : index
    %c0_63 = arith.constant 0 : index
    %252 = vector.load %arg5[%c0_62, %c0_63] : memref<1x128xf32, #tpu.memory_space<vmem>>, vector<1x128xf32>
    %253 = vector.broadcast %252 : vector<1x128xf32> to vector<2x128xf32>
    %254 = arith.addf %251, %253 : vector<2x128xf32>
    %cst_64 = arith.constant dense<0xFF800000> : vector<2xf32>
    %255 = vector.multi_reduction <maximumf>, %254, %cst_64 [1] : vector<2x128xf32> to vector<2xf32>
    %256 = vector.shape_cast %255 : vector<2xf32> to vector<2x1xf32>
    %257 = vector.broadcast %256 : vector<2x1xf32> to vector<2x128xf32>
    %258 = arith.subf %254, %257 : vector<2x128xf32>
    %259 = math.exp %258 : vector<2x128xf32>
    %cst_65 = arith.constant dense<0.000000e+00> : vector<2xf32>
    %260 = vector.multi_reduction <add>, %259, %cst_65 [1] : vector<2x128xf32> to vector<2xf32>
    %261 = vector.shape_cast %260 : vector<2xf32> to vector<2x1xf32>
    %262 = math.log %261 : vector<2x1xf32>
    %263 = arith.addf %256, %262 : vector<2x1xf32>
    %264 = vector.broadcast %263 : vector<2x1xf32> to vector<2x128xf32>
    %265 = arith.subf %254, %264 : vector<2x128xf32>
    %c0_66 = arith.constant 0 : index
    %c0_67 = arith.constant 0 : index
    %266 = vector.load %arg6[%c0_66, %c0_67] : memref<2x128xf32, #tpu.memory_space<vmem>>, vector<2x128xf32>
    tpu.vector_store %arg6[%c0_66, %c0_67], %265 {strides = array<i32>} : memref<2x128xf32, #tpu.memory_space<vmem>>, vector<2x128xf32>,
    return
  }
}

</mosaic_0001>

<llo_original>
// kernel: sentiment_forward.1
$region0: #{sentiment_forward.1}
  #allocation0 [shape = 'u32[]', space=smem, size = 0x4, offset = 0x4, fixed_abs, tag = 'smem constant byte address 0x4 - core index']
  #allocation1 [shape = 'u32[72,128]{1,0:T(1,128)}', space=vmem, size = 0x9000, scoped, tag = 'internal scratch']
  #allocation2 [shape = 'f32[16,128]{1,0:T(8,128)}', space=vmem, size = 0x2000, scoped, tag = 'scratch operand']
  %s0 = inlined_call_operand.vmem [shape: f32[16,16], index: 0, kind: input, shape index: {}]
  %s1 = inlined_call_operand.vmem [shape: f32[16,128], index: 1, kind: input, shape index: {}]
  %s2 = inlined_call_operand.vmem [shape: f32[32,128], index: 2, kind: input, shape index: {}]
  %s3 = inlined_call_operand.vmem [shape: f32[1,128], index: 3, kind: input, shape index: {}]
  %s4 = inlined_call_operand.vmem [shape: f32[32,128], index: 4, kind: input, shape index: {}]
  %s5 = inlined_call_operand.vmem [shape: f32[1,128], index: 5, kind: input, shape index: {}]
  %s6 = inlined_call_operand.hbm [shape: f32[2,128], index: 6, kind: output, shape index: {}]
  %s7 = sld [smem:[#allocation0]]
  $region34: #{sentiment_forward.1} parent=0
    _
  %s9 = ssub.s32 1, %s7
  %s10 = scalar_select 0, %s9, %s7
  $region1: #{sentiment_forward.1} parent=0
    #allocation3 [shape = 'u8[1024]{0}', space=vmem, size = 0x400, scoped, tag = 'output window, operand 0, single buffered']
    #allocation4 [shape = 's32[1]{0}', space=sflag, size = 0x4, scoped, tag = 'scoped memory for sentiment_forward.1']
    %11 = vsyncpa [#allocation4], 0
    // Predicated region
    $region2: #{sentiment_forward.1} parent=1 // pred_check
      _
    $region3: #{sentiment_forward.1} parent=1 // pred_check_branch
      %13 = sbr.rel (0) target = $region5
    $region4: #{sentiment_forward.1} parent=1 // pred_region
      _
    $region5: #{sentiment_forward.1} parent=1 // pred_fallthru
      _
    // Predicated region
    $region6: #{sentiment_forward.1} parent=1 // pred_check
      _
    $region7: #{sentiment_forward.1} parent=1 // pred_check_branch
      %15 = sbr.rel (0) target = $region9
    $region8: #{sentiment_forward.1} parent=1 // pred_region
      _
    $region9: #{sentiment_forward.1} parent=1 // pred_fallthru
      _
    // Predicated region
    $region10: #{sentiment_forward.1} parent=1 // pred_check
      _
    $region11: #{sentiment_forward.1} parent=1 // pred_check_branch
      %17 = sbr.rel (0) target = $region13
    $region12: #{sentiment_forward.1} parent=1 // pred_region
      _
    $region13: #{sentiment_forward.1} parent=1 // pred_fallthru
      _
    // Predicated region
    $region14: #{sentiment_forward.1} parent=1 // pred_check
      _
    $region15: #{sentiment_forward.1} parent=1 // pred_check_branch
      %19 = sbr.rel (0) target = $region17
    $region16: #{sentiment_forward.1} parent=1 // pred_region
      _
    $region17: #{sentiment_forward.1} parent=1 // pred_fallthru
      _
    // Predicated region
    $region18: #{sentiment_forward.1} parent=1 // pred_check
      _
    $region19: #{sentiment_forward.1} parent=1 // pred_check_branch
      %21 = sbr.rel (0) target = $region21
    $region20: #{sentiment_forward.1} parent=1 // pred_region
      _
    $region21: #{sentiment_forward.1} parent=1 // pred_fallthru
      _
    // Predicated region
    $region22: #{sentiment_forward.1} parent=1 // pred_check
      _
    $region23: #{sentiment_forward.1} parent=1 // pred_check_branch
      %23 = sbr.rel (0) target = $region25
    $region24: #{sentiment_forward.1} parent=1 // pred_region
      _
    $region25: #{sentiment_forward.1} parent=1 // pred_fallthru
      _
    %v24 = vld [vmem:[%s0] sm:$0xff]
    %v25 = vld [vmem:[%s0 + $0x8] sm:$0xff]
    %v26 = vld [vmem:[%s1] sm:$0xff]
    %v27 = vld [vmem:[%s1 + $0x8] sm:$0xff]
    %v28 = vld [vmem:[%s3] sm:$0x1]
    %v30 = vperm.slane %v28, 0
    %vm32 = vcmask 130048
    %v34 = vsel %vm32, %v24, 0
    %v37 = vsel %vm32, %v25, 0
    %39 = vmatpush.msra.mxu0 0.0
    %40 = vmatpush.msra.mxu0 0.0
    %41 = vmatpush.msra.mxu0 0.0
    %42 = vmatpush.msra.mxu0 0.0
    %43 = vmatpush.msra.mxu0 0.0
    %44 = vmatpush.msra.mxu0 0.0
    %45 = vmatpush.msra.mxu0 0.0
    %46 = vmatpush.msra.mxu0 0.0
    %47 = vmatpush.msra.mxu0 0.0
    %48 = vmatpush.msra.mxu0 0.0
    %49 = vmatpush.msra.mxu0 0.0
    %50 = vmatpush.msra.mxu0 0.0
    %51 = vmatpush.msra.mxu0 0.0
    %52 = vmatpush.msra.mxu0 0.0
    %53 = vmatpush.msra.mxu0 %v27
    %54 = vmatpush.msra.mxu0 %v26
    %55 = vmatmul.f32.gmra.mxu0 %v34
    %v56 = vpop.f32.mrf.mxu0
    %v57 = vadd.f32 %v30, %v56
    %58 = vmatmul.f32.gmra.mxu0 %v37
    %v59 = vpop.f32.mrf.mxu0
    %v60 = vadd.f32 %v30, %v59
    %61 = vdwg.mxu0
    %62 = vst [vmem:[#allocation2] sm:$0xff] %v57
    %63 = vst [vmem:[#allocation2 + $0x8] sm:$0xff] %v60
    %v64 = vld [vmem:[%s2] sm:$0xff]
    %v65 = vld [vmem:[%s2 + $0x8] sm:$0xff]
    %v66 = vld [vmem:[%s2 + $0x10] sm:$0xff]
    %v67 = vld [vmem:[%s2 + $0x18] sm:$0xff]
    %v68 = vld [vmem:[#allocation2] sm:$0x3]
    %vm69 = vcmask 261120
    %v71 = vsel %vm69, 0.0, 0
    %73 = vmatpush.msra.mxu0 0.0
    %74 = vmatpush.msra.mxu0 0.0
    %75 = vmatpush.msra.mxu0 0.0
    %76 = vmatpush.msra.mxu0 0.0
    %77 = vmatpush.msra.mxu0 0.0
    %78 = vmatpush.msra.mxu0 0.0
    %79 = vmatpush.msra.mxu0 0.0
    %80 = vmatpush.msra.mxu0 0.0
    %81 = vmatpush.msra.mxu0 0.0
    %82 = vmatpush.msra.mxu0 0.0
    %83 = vmatpush.msra.mxu0 0.0
    %84 = vmatpush.msra.mxu0 0.0
    %85 = vmatpush.msra.mxu0 %v67
    %86 = vmatpush.msra.mxu0 %v66
    %87 = vmatpush.msra.mxu0 %v65
    %88 = vmatpush.msra.mxu0 %v64
    %89 = vmatmul.f32.gmra.mxu0 %v71
    %v90 = vpop.f32.mrf.mxu0
    %v91 = vadd.f32 0.0, %v90
    %92 = vdwg.mxu0
    %v93 = vadd.f32 %v68, %v91
    %v94 = vxor.u32 %v93, 2147483648
    %v95 = vmul.f32 %v94, 1.442695
    %v96 = vpow.pop %v95
    %v97 = vadd.f32 %v96, 1.0
    %v98 = vrcp.pop %v97
    %v99 = vmul.f32 %v97, %v98
    %v100 = vsub.f32 1.0, %v99
    %v101 = vmul.f32 %v98, %v100
    %v102 = vadd.f32 %v98, %v101
    %vm103 = vweird.f32 %v97
    %vm104 = vweird.f32 %v98
    %vm105 = vmor %vm103, %vm104
    %v106 = vsel %vm105, %v98, %v102
    %v107 = vand.u32 2147483647, %v97
    %vm108 = vcmp.eq.f32.partialorder %v107, 8.507059e+37
    %v109 = vand.u32 %v97, 2147483648
    %v110 = vor.u32 1.1754944e-38, %v109
    %v111 = vsel %vm108, %v110, %v106
    %v112 = vmul.f32 1.0, %v111
    %v113 = vtanh.pop %v93
    %v114 = vmul.f32 %v112, 0.0
    %116 = vrot.lane.b32.xlu0 %v113, 64
    %v117 = vpop.permute.xlu0 %116
    %v119 = vmul.f32 %v112, %v117
    %121 = vrot.lane.b32.xlu0 %v119, 32
    %v122 = vpop.permute.xlu0 %121
    %v124 = vadd.f32 %v114, %v122
    %v125 = vtanh.pop %v124
    %127 = vrot.lane.b32.xlu0 %v125, 64
    %v128 = vpop.permute.xlu0 %127
    %v130 = vmul.f32 %v112, %v128
    %v131 = vld [vmem:[#allocation2 + $0x2] sm:$0x3]
    %133 = vrot.lane.b32.xlu0 %v130, 32
    %v134 = vpop.permute.xlu0 %133
    %v135 = vsel %vm69, %v134, 0
    %137 = vmatpush.msra.mxu0 0.0
    %138 = vmatpush.msra.mxu0 0.0
    %139 = vmatpush.msra.mxu0 0.0
    %140 = vmatpush.msra.mxu0 0.0
    %141 = vmatpush.msra.mxu0 0.0
    %142 = vmatpush.msra.mxu0 0.0
    %143 = vmatpush.msra.mxu0 0.0
    %144 = vmatpush.msra.mxu0 0.0
    %145 = vmatpush.msra.mxu0 0.0
    %146 = vmatpush.msra.mxu0 0.0
    %147 = vmatpush.msra.mxu0 0.0
    %148 = vmatpush.msra.mxu0 0.0
    %149 = vmatpush.msra.mxu0 %v67
    %150 = vmatpush.msra.mxu0 %v66
    %151 = vmatpush.msra.mxu0 %v65
    %152 = vmatpush.msra.mxu0 %v64
    %153 = vmatmul.f32.gmra.mxu0 %v135
    %v154 = vpop.f32.mrf.mxu0
    %v155 = vadd.f32 0.0, %v154
    %156 = vdwg.mxu0
    %v157 = vadd.f32 %v131, %v155
    %v158 = vxor.u32 %v157, 2147483648
    %v159 = vmul.f32 %v158, 1.442695
    %v160 = vpow.pop %v159
    %v161 = vadd.f32 %v160, 1.0
    %v162 = vrcp.pop %v161
    %v163 = vmul.f32 %v161, %v162
    %v164 = vsub.f32 1.0, %v163
    %v165 = vmul.f32 %v162, %v164
    %v166 = vadd.f32 %v162, %v165
    %vm167 = vweird.f32 %v161
    %vm168 = vweird.f32 %v162
    %vm169 = vmor %vm167, %vm168
    %v170 = vsel %vm169, %v162, %v166
    %v171 = vand.u32 2147483647, %v161
    %vm172 = vcmp.eq.f32.partialorder %v171, 8.507059e+37
    %v173 = vand.u32 %v161, 2147483648
    %v174 = vor.u32 1.1754944e-38, %v173
    %v175 = vsel %vm172, %v174, %v170
    %v176 = vmul.f32 1.0, %v175
    %v177 = vtanh.pop %v157
    %v178 = vmul.f32 %v176, %v124
    %180 = vrot.lane.b32.xlu0 %v177, 64
    %v181 = vpop.permute.xlu0 %180
    %v183 = vmul.f32 %v176, %v181
    %185 = vrot.lane.b32.xlu0 %v183, 32
    %v186 = vpop.permute.xlu0 %185
    %v188 = vadd.f32 %v178, %v186
    %v189 = vtanh.pop %v188
    %191 = vrot.lane.b32.xlu0 %v189, 64
    %v192 = vpop.permute.xlu0 %191
    %v194 = vmul.f32 %v176, %v192
    %v195 = vld [vmem:[#allocation2 + $0x4] sm:$0x3]
    %197 = vrot.lane.b32.xlu0 %v194, 32
    %v198 = vpop.permute.xlu0 %197
    %v199 = vsel %vm69, %v198, 0
    %201 = vmatpush.msra.mxu0 0.0
    %202 = vmatpush.msra.mxu0 0.0
    %203 = vmatpush.msra.mxu0 0.0
    %204 = vmatpush.msra.mxu0 0.0
    %205 = vmatpush.msra.mxu0 0.0
    %206 = vmatpush.msra.mxu0 0.0
    %207 = vmatpush.msra.mxu0 0.0
    %208 = vmatpush.msra.mxu0 0.0
    %209 = vmatpush.msra.mxu0 0.0
    %210 = vmatpush.msra.mxu0 0.0
    %211 = vmatpush.msra.mxu0 0.0
    %212 = vmatpush.msra.mxu0 0.0
    %213 = vmatpush.msra.mxu0 %v67
    %214 = vmatpush.msra.mxu0 %v66
    %215 = vmatpush.msra.mxu0 %v65
    %216 = vmatpush.msra.mxu0 %v64
    %217 = vmatmul.f32.gmra.mxu0 %v199
    %v218 = vpop.f32.mrf.mxu0
    %v219 = vadd.f32 0.0, %v218
    %220 = vdwg.mxu0
    %v221 = vadd.f32 %v195, %v219
    %v222 = vxor.u32 %v221, 2147483648
    %v223 = vmul.f32 %v222, 1.442695
    %v224 = vpow.pop %v223
    %v225 = vadd.f32 %v224, 1.0
    %v226 = vrcp.pop %v225
    %v227 = vmul.f32 %v225, %v226
    %v228 = vsub.f32 1.0, %v227
    %v229 = vmul.f32 %v226, %v228
    %v230 = vadd.f32 %v226, %v229
    %vm231 = vweird.f32 %v225
    %vm232 = vweird.f32 %v226
    %vm233 = vmor %vm231, %vm232
    %v234 = vsel %vm233, %v226, %v230
    %v235 = vand.u32 2147483647, %v225
    %vm236 = vcmp.eq.f32.partialorder %v235, 8.507059e+37
    %v237 = vand.u32 %v225, 2147483648
    %v238 = vor.u32 1.1754944e-38, %v237
    %v239 = vsel %vm236, %v238, %v234
    %v240 = vmul.f32 1.0, %v239
    %v241 = vtanh.pop %v221
    %v242 = vmul.f32 %v240, %v188
    %244 = vrot.lane.b32.xlu0 %v241, 64
    %v245 = vpop.permute.xlu0 %244
    %v247 = vmul.f32 %v240, %v245
    %249 = vrot.lane.b32.xlu0 %v247, 32
    %v250 = vpop.permute.xlu0 %249
    %v252 = vadd.f32 %v242, %v250
    %v253 = vtanh.pop %v252
    %255 = vrot.lane.b32.xlu0 %v253, 64
    %v256 = vpop.permute.xlu0 %255
    %v258 = vmul.f32 %v240, %v256
    %v259 = vld [vmem:[#allocation2 + $0x6] sm:$0x3]
    %261 = vrot.lane.b32.xlu0 %v258, 32
    %v262 = vpop.permute.xlu0 %261
    %v263 = vsel %vm69, %v262, 0
    %265 = vmatpush.msra.mxu0 0.0
    %266 = vmatpush.msra.mxu0 0.0
    %267 = vmatpush.msra.mxu0 0.0
    %268 = vmatpush.msra.mxu0 0.0
    %269 = vmatpush.msra.mxu0 0.0
    %270 = vmatpush.msra.mxu0 0.0
    %271 = vmatpush.msra.mxu0 0.0
    %272 = vmatpush.msra.mxu0 0.0
    %273 = vmatpush.msra.mxu0 0.0
    %274 = vmatpush.msra.mxu0 0.0
    %275 = vmatpush.msra.mxu0 0.0
    %276 = vmatpush.msra.mxu0 0.0
    %277 = vmatpush.msra.mxu0 %v67
    %278 = vmatpush.msra.mxu0 %v66
    %279 = vmatpush.msra.mxu0 %v65
    %280 = vmatpush.msra.mxu0 %v64
    %281 = vmatmul.f32.gmra.mxu0 %v263
    %v282 = vpop.f32.mrf.mxu0
    %v283 = vadd.f32 0.0, %v282
    %284 = vdwg.mxu0
    %v285 = vadd.f32 %v259, %v283
    %v286 = vxor.u32 %v285, 2147483648
    %v287 = vmul.f32 %v286, 1.442695
    %v288 = vpow.pop %v287
    %v289 = vadd.f32 %v288, 1.0
    %v290 = vrcp.pop %v289
    %v291 = vmul.f32 %v289, %v290
    %v292 = vsub.f32 1.0, %v291
    %v293 = vmul.f32 %v290, %v292
    %v294 = vadd.f32 %v290, %v293
    %vm295 = vweird.f32 %v289
    %vm296 = vweird.f32 %v290
    %vm297 = vmor %vm295, %vm296
    %v298 = vsel %vm297, %v290, %v294
    %v299 = vand.u32 2147483647, %v289
    %vm300 = vcmp.eq.f32.partialorder %v299, 8.507059e+37
    %v301 = vand.u32 %v289, 2147483648
    %v302 = vor.u32 1.1754944e-38, %v301
    %v303 = vsel %vm300, %v302, %v298
    %v304 = vmul.f32 1.0, %v303
    %v305 = vtanh.pop %v285
    %v306 = vmul.f32 %v304, %v252
    %308 = vrot.lane.b32.xlu0 %v305, 64
    %v309 = vpop.permute.xlu0 %308
    %v311 = vmul.f32 %v304, %v309
    %313 = vrot.lane.b32.xlu0 %v311, 32
    %v314 = vpop.permute.xlu0 %313
    %v316 = vadd.f32 %v306, %v314
    %v317 = vtanh.pop %v316
    %319 = vrot.lane.b32.xlu0 %v317, 64
    %v320 = vpop.permute.xlu0 %319
    %v322 = vmul.f32 %v304, %v320
    %v323 = vld [vmem:[#allocation2 + $0x8] sm:$0x3]
    %325 = vrot.lane.b32.xlu0 %v322, 32
    %v326 = vpop.permute.xlu0 %325
    %v327 = vsel %vm69, %v326, 0
    %329 = vmatpush.msra.mxu0 0.0
    %330 = vmatpush.msra.mxu0 0.0
    %331 = vmatpush.msra.mxu0 0.0
    %332 = vmatpush.msra.mxu0 0.0
    %333 = vmatpush.msra.mxu0 0.0
    %334 = vmatpush.msra.mxu0 0.0
    %335 = vmatpush.msra.mxu0 0.0
    %336 = vmatpush.msra.mxu0 0.0
    %337 = vmatpush.msra.mxu0 0.0
    %338 = vmatpush.msra.mxu0 0.0
    %339 = vmatpush.msra.mxu0 0.0
    %340 = vmatpush.msra.mxu0 0.0
    %341 = vmatpush.msra.mxu0 %v67
    %342 = vmatpush.msra.mxu0 %v66
    %343 = vmatpush.msra.mxu0 %v65
    %344 = vmatpush.msra.mxu0 %v64
    %345 = vmatmul.f32.gmra.mxu0 %v327
    %v346 = vpop.f32.mrf.mxu0
    %v347 = vadd.f32 0.0, %v346
    %348 = vdwg.mxu0
    %v349 = vadd.f32 %v323, %v347
    %v350 = vxor.u32 %v349, 2147483648
    %v351 = vmul.f32 %v350, 1.442695
    %v352 = vpow.pop %v351
    %v353 = vadd.f32 %v352, 1.0
    %v354 = vrcp.pop %v353
    %v355 = vmul.f32 %v353, %v354
    %v356 = vsub.f32 1.0, %v355
    %v357 = vmul.f32 %v354, %v356
    %v358 = vadd.f32 %v354, %v357
    %vm359 = vweird.f32 %v353
    %vm360 = vweird.f32 %v354
    %vm361 = vmor %vm359, %vm360
    %v362 = vsel %vm361, %v354, %v358
    %v363 = vand.u32 2147483647, %v353
    %vm364 = vcmp.eq.f32.partialorder %v363, 8.507059e+37
    %v365 = vand.u32 %v353, 2147483648
    %v366 = vor.u32 1.1754944e-38, %v365
    %v367 = vsel %vm364, %v366, %v362
    %v368 = vmul.f32 1.0, %v367
    %v369 = vtanh.pop %v349
    %v370 = vmul.f32 %v368, %v316
    %372 = vrot.lane.b32.xlu0 %v369, 64
    %v373 = vpop.permute.xlu0 %372
    %v375 = vmul.f32 %v368, %v373
    %377 = vrot.lane.b32.xlu0 %v375, 32
    %v378 = vpop.permute.xlu0 %377
    %v380 = vadd.f32 %v370, %v378
    %v381 = vtanh.pop %v380
    %383 = vrot.lane.b32.xlu0 %v381, 64
    %v384 = vpop.permute.xlu0 %383
    %v386 = vmul.f32 %v368, %v384
    %v387 = vld [vmem:[#allocation2 + $0xa] sm:$0x3]
    %389 = vrot.lane.b32.xlu0 %v386, 32
    %v390 = vpop.permute.xlu0 %389
    %v391 = vsel %vm69, %v390, 0
    %393 = vmatpush.msra.mxu0 0.0
    %394 = vmatpush.msra.mxu0 0.0
    %395 = vmatpush.msra.mxu0 0.0
    %396 = vmatpush.msra.mxu0 0.0
    %397 = vmatpush.msra.mxu0 0.0
    %398 = vmatpush.msra.mxu0 0.0
    %399 = vmatpush.msra.mxu0 0.0
    %400 = vmatpush.msra.mxu0 0.0
    %401 = vmatpush.msra.mxu0 0.0
    %402 = vmatpush.msra.mxu0 0.0
    %403 = vmatpush.msra.mxu0 0.0
    %404 = vmatpush.msra.mxu0 0.0
    %405 = vmatpush.msra.mxu0 %v67
    %406 = vmatpush.msra.mxu0 %v66
    %407 = vmatpush.msra.mxu0 %v65
    %408 = vmatpush.msra.mxu0 %v64
    %409 = vmatmul.f32.gmra.mxu0 %v391
    %v410 = vpop.f32.mrf.mxu0
    %v411 = vadd.f32 0.0, %v410
    %412 = vdwg.mxu0
    %v413 = vadd.f32 %v387, %v411
    %v414 = vxor.u32 %v413, 2147483648
    %v415 = vmul.f32 %v414, 1.442695
    %v416 = vpow.pop %v415
    %v417 = vadd.f32 %v416, 1.0
    %v418 = vrcp.pop %v417
    %v419 = vmul.f32 %v417, %v418
    %v420 = vsub.f32 1.0, %v419
    %v421 = vmul.f32 %v418, %v420
    %v422 = vadd.f32 %v418, %v421
    %vm423 = vweird.f32 %v417
    %vm424 = vweird.f32 %v418
    %vm425 = vmor %vm423, %vm424
    %v426 = vsel %vm425, %v418, %v422
    %v427 = vand.u32 2147483647, %v417
    %vm428 = vcmp.eq.f32.partialorder %v427, 8.507059e+37
    %v429 = vand.u32 %v417, 2147483648
    %v430 = vor.u32 1.1754944e-38, %v429
    %v431 = vsel %vm428, %v430, %v426
    %v432 = vmul.f32 1.0, %v431
    %v433 = vtanh.pop %v413
    %v434 = vmul.f32 %v432, %v380
    %436 = vrot.lane.b32.xlu0 %v433, 64
    %v437 = vpop.permute.xlu0 %436
    %v439 = vmul.f32 %v432, %v437
    %441 = vrot.lane.b32.xlu0 %v439, 32
    %v442 = vpop.permute.xlu0 %441
    %v444 = vadd.f32 %v434, %v442
    %v445 = vtanh.pop %v444
    %447 = vrot.lane.b32.xlu0 %v445, 64
    %v448 = vpop.permute.xlu0 %447
    %v450 = vmul.f32 %v432, %v448
    %v451 = vld [vmem:[#allocation2 + $0xc] sm:$0x3]
    %453 = vrot.lane.b32.xlu0 %v450, 32
    %v454 = vpop.permute.xlu0 %453
    %v455 = vsel %vm69, %v454, 0
    %457 = vmatpush.msra.mxu0 0.0
    %458 = vmatpush.msra.mxu0 0.0
    %459 = vmatpush.msra.mxu0 0.0
    %460 = vmatpush.msra.mxu0 0.0
    %461 = vmatpush.msra.mxu0 0.0
    %462 = vmatpush.msra.mxu0 0.0
    %463 = vmatpush.msra.mxu0 0.0
    %464 = vmatpush.msra.mxu0 0.0
    %465 = vmatpush.msra.mxu0 0.0
    %466 = vmatpush.msra.mxu0 0.0
    %467 = vmatpush.msra.mxu0 0.0
    %468 = vmatpush.msra.mxu0 0.0
    %469 = vmatpush.msra.mxu0 %v67
    %470 = vmatpush.msra.mxu0 %v66
    %471 = vmatpush.msra.mxu0 %v65
    %472 = vmatpush.msra.mxu0 %v64
    %473 = vmatmul.f32.gmra.mxu0 %v455
    %v474 = vpop.f32.mrf.mxu0
    %v475 = vadd.f32 0.0, %v474
    %476 = vdwg.mxu0
    %v477 = vadd.f32 %v451, %v475
    %v478 = vxor.u32 %v477, 2147483648
    %v479 = vmul.f32 %v478, 1.442695
    %v480 = vpow.pop %v479
    %v481 = vadd.f32 %v480, 1.0
    %v482 = vrcp.pop %v481
    %v483 = vmul.f32 %v481, %v482
    %v484 = vsub.f32 1.0, %v483
    %v485 = vmul.f32 %v482, %v484
    %v486 = vadd.f32 %v482, %v485
    %vm487 = vweird.f32 %v481
    %vm488 = vweird.f32 %v482
    %vm489 = vmor %vm487, %vm488
    %v490 = vsel %vm489, %v482, %v486
    %v491 = vand.u32 2147483647, %v481
    %vm492 = vcmp.eq.f32.partialorder %v491, 8.507059e+37
    %v493 = vand.u32 %v481, 2147483648
    %v494 = vor.u32 1.1754944e-38, %v493
    %v495 = vsel %vm492, %v494, %v490
    %v496 = vmul.f32 1.0, %v495
    %v497 = vtanh.pop %v477
    %v498 = vmul.f32 %v496, %v444
    %500 = vrot.lane.b32.xlu0 %v497, 64
    %v501 = vpop.permute.xlu0 %500
    %v503 = vmul.f32 %v496, %v501
    %505 = vrot.lane.b32.xlu0 %v503, 32
    %v506 = vpop.permute.xlu0 %505
    %v508 = vadd.f32 %v498, %v506
    %v509 = vtanh.pop %v508
    %511 = vrot.lane.b32.xlu0 %v509, 64
    %v512 = vpop.permute.xlu0 %511
    %v514 = vmul.f32 %v496, %v512
    %v515 = vld [vmem:[#allocation2 + $0xe] sm:$0x3]
    %517 = vrot.lane.b32.xlu0 %v514, 32
    %v518 = vpop.permute.xlu0 %517
    %v519 = vsel %vm69, %v518, 0
    %521 = vmatpush.msra.mxu0 0.0
    %522 = vmatpush.msra.mxu0 0.0
    %523 = vmatpush.msra.mxu0 0.0
    %524 = vmatpush.msra.mxu0 0.0
    %525 = vmatpush.msra.mxu0 0.0
    %526 = vmatpush.msra.mxu0 0.0
    %527 = vmatpush.msra.mxu0 0.0
    %528 = vmatpush.msra.mxu0 0.0
    %529 = vmatpush.msra.mxu0 0.0
    %530 = vmatpush.msra.mxu0 0.0
    %531 = vmatpush.msra.mxu0 0.0
    %532 = vmatpush.msra.mxu0 0.0
    %533 = vmatpush.msra.mxu0 %v67
    %534 = vmatpush.msra.mxu0 %v66
    %535 = vmatpush.msra.mxu0 %v65
    %536 = vmatpush.msra.mxu0 %v64
    %537 = vmatmul.f32.gmra.mxu0 %v519
    %v538 = vpop.f32.mrf.mxu0
    %v539 = vadd.f32 0.0, %v538
    %540 = vdwg.mxu0
    %v541 = vadd.f32 %v515, %v539
    %v542 = vxor.u32 %v541, 2147483648
    %v543 = vmul.f32 %v542, 1.442695
    %v544 = vpow.pop %v543
    %v545 = vadd.f32 %v544, 1.0
    %v546 = vrcp.pop %v545
    %v547 = vmul.f32 %v545, %v546
    %v548 = vsub.f32 1.0, %v547
    %v549 = vmul.f32 %v546, %v548
    %v550 = vadd.f32 %v546, %v549
    %vm551 = vweird.f32 %v545
    %vm552 = vweird.f32 %v546
    %vm553 = vmor %vm551, %vm552
    %v554 = vsel %vm553, %v546, %v550
    %v555 = vand.u32 2147483647, %v545
    %vm556 = vcmp.eq.f32.partialorder %v555, 8.507059e+37
    %v557 = vand.u32 %v545, 2147483648
    %v558 = vor.u32 1.1754944e-38, %v557
    %v559 = vsel %vm556, %v558, %v554
    %v560 = vmul.f32 1.0, %v559
    %v561 = vtanh.pop %v541
    %v562 = vmul.f32 %v560, %v508
    %564 = vrot.lane.b32.xlu0 %v561, 64
    %v565 = vpop.permute.xlu0 %564
    %v567 = vmul.f32 %v560, %v565
    %569 = vrot.lane.b32.xlu0 %v567, 32
    %v570 = vpop.permute.xlu0 %569
    %v572 = vadd.f32 %v562, %v570
    %v573 = vtanh.pop %v572
    %575 = vrot.lane.b32.xlu0 %v573, 64
    %v576 = vpop.permute.xlu0 %575
    %v578 = vmul.f32 %v560, %v576
    %v579 = vld [vmem:[%s4] sm:$0xff]
    %v580 = vld [vmem:[%s4 + $0x8] sm:$0xff]
    %v581 = vld [vmem:[%s4 + $0x10] sm:$0xff]
    %v582 = vld [vmem:[%s4 + $0x18] sm:$0xff]
    %v583 = vld [vmem:[%s5] sm:$0x1]
    %v585 = vperm.slane %v583, 0
    %588 = vrot.lane.b32.xlu0 %v578, 32
    %v589 = vpop.permute.xlu0 %588
    %v590 = vsel %vm69, %v589, 0
    %592 = vmatpush.msra.mxu0 0.0
    %593 = vmatpush.msra.mxu0 0.0
    %594 = vmatpush.msra.mxu0 0.0
    %595 = vmatpush.msra.mxu0 0.0
    %596 = vmatpush.msra.mxu0 0.0
    %597 = vmatpush.msra.mxu0 0.0
    %598 = vmatpush.msra.mxu0 0.0
    %599 = vmatpush.msra.mxu0 0.0
    %600 = vmatpush.msra.mxu0 0.0
    %601 = vmatpush.msra.mxu0 0.0
    %602 = vmatpush.msra.mxu0 0.0
    %603 = vmatpush.msra.mxu0 0.0
    %604 = vmatpush.msra.mxu0 %v582
    %605 = vmatpush.msra.mxu0 %v581
    %606 = vmatpush.msra.mxu0 %v580
    %607 = vmatpush.msra.mxu0 %v579
    %608 = vmatmul.f32.gmra.mxu0 %v590
    %v609 = vpop.f32.mrf.mxu0
    %v610 = vadd.f32 %v585, %v609
    %611 = vdwg.mxu0
    %vm612 = vcmask 1041408
    %v613 = vsel %vm612, %v610, -inf
    %614 = vmax.xlane.f32.xlu0 %v613
    %v615 = vpop.xlane.xlu0 %614
    %v616 = vsub.f32 %v610, %v615
    %v617 = vmul.f32 %v616, 1.442695
    %v618 = vpow.pop %v617
    %v619 = vsel %vm612, %v618, 0.0
    %620 = vadd.xlane.f32.xlu0 %v619
    %v621 = vpop.xlane.xlu0 %620
    %v622 = vlog2.pop %v621
    %v623 = vmul.f32 %v622, 0.6931472
    %v624 = vadd.f32 %v615, %v623
    %v625 = vsub.f32 %v610, %v624
    %626 = vst [vmem:[#allocation3] sm:$0x3] %v625
    // Predicated region
    $region26: #{sentiment_forward.1} parent=1 // pred_check
      _
    $region27: #{sentiment_forward.1} parent=1 // pred_check_branch
      %628 = sbr.rel (0) target = $region29
    $region28: #{sentiment_forward.1} parent=1 // pred_region
      %630 = vsyncadd [#allocation4], 0
      %s632 = sshll.u32 [#allocation3], 4
      %s633 = int_to_ptr.vmem [resolvable:$true] %s632
      %s634 = sshll.u32 %s6, 4
      %s635 = int_to_ptr.hbm [resolvable:$true] %s634
      %637 = dma.vmem_to_hbm [thread:$0]  %s633, 32, %s635, [#allocation4]
    $region29: #{sentiment_forward.1} parent=1 // pred_fallthru
      _
    // Predicated region
    $region30: #{sentiment_forward.1} parent=1 // pred_check
      _
    $region31: #{sentiment_forward.1} parent=1 // pred_check_branch
      %639 = sbr.rel (0) target = $region33
    $region32: #{sentiment_forward.1} parent=1 // pred_region
      %641 = dma.done [#allocation4], 32
    $region33: #{sentiment_forward.1} parent=1 // pred_fallthru
      _
    %642 = vsyncpa [#allocation4], 1

</llo_original>
